<compile_context>
chip_gen: v6e
topology: v6e:2x2x1
jax: 0.10.0
libtpu: 0.0.40
codegen_flags: <defaults>
</compile_context>

<pallas_src>
import jax
import jax.numpy as jnp
from jax.experimental import pallas as pl
from jax.experimental.pallas import tpu as pltpu


def _round_up(x: int, m: int) -> int:
    return ((x + m - 1) // m) * m


def _cdiv(a: int, b: int) -> int:
    return -(-a // b)


def _pick_tile(dim: int, req: int, align: int) -> int:
    """Largest tile <= req (aligned), split evenly so padding stays < one tile."""
    req = max(align, _round_up(int(req), align))
    if dim <= req:
        return _round_up(dim, align)
    nt = _cdiv(dim, req)
    return min(req, _round_up(_cdiv(dim, nt), align))


# ------------------------------- kernels -------------------------------------


def _cos_kernel_2d(x1_ref, x2_ref, r1_ref, r2_ref, o_ref):
    # grid = (M//tm, N//tn); full feature dim resident in VMEM.
    acc = jax.lax.dot_general(
        x1_ref[...], x2_ref[...],
        dimension_numbers=(((1,), (1,)), ((), ())),  # contract last dims (NT, no .T)
        preferred_element_type=jnp.float32,
    )
    o_ref[...] = (acc * r1_ref[...] * r2_ref[...]).astype(o_ref.dtype)


def _make_cos_kernel_3d(acc_in_out: bool):
    # grid = (M//tm, N//tn, D//tk); axis 2 is the reduction axis.
    def kernel(x1_ref, x2_ref, r1_ref, r2_ref, o_ref, *scratch):
        acc_ref = o_ref if acc_in_out else scratch[0]
        k = pl.program_id(2)

        @pl.when(k == 0)
        def _init():
            acc_ref[...] = jnp.zeros_like(acc_ref)

        acc_ref[...] += jax.lax.dot_general(
            x1_ref[...], x2_ref[...],
            dimension_numbers=(((1,), (1,)), ((), ())),
            preferred_element_type=jnp.float32,
        )

        @pl.when(k == pl.num_programs(2) - 1)
        def _finish():
            res = acc_ref[...] * r1_ref[...] * r2_ref[...]
            o_ref[...] = res.astype(o_ref.dtype)

    return kernel


# ------------------------------- wrapper --------------------------------------


def cosine_similarity(x1, x2, *, tm=None, tn=256, tk=None, matmul_dtype=None):
    """x1: [M, D], x2: [N, D] -> [M, N] all-pairs cosine similarity."""
    M, D = x1.shape
    N, D2 = x2.shape
    assert D == D2, "feature dims must match"

    out_dtype = jnp.result_type(x1.dtype, x2.dtype)
    mm_dtype = jnp.dtype(matmul_dtype) if matmul_dtype is not None else jnp.dtype(out_dtype)
    in_itemsize = mm_dtype.itemsize
    out_itemsize = jnp.dtype(out_dtype).itemsize

    # Hoisted inverse-norm pass: O((M+N)*D), negligible next to the O(M*N*D)
    # matmul.  Zero-norm -> 0 reproduces the reference's NaN -> 0 behavior
    # without generating inf/NaN in the kernel epilogue.
    s1 = jnp.sum(jnp.square(x1.astype(jnp.float32)), axis=1, keepdims=True)   # [M,1]
    s2 = jnp.sum(jnp.square(x2.astype(jnp.float32)), axis=1, keepdims=True)   # [N,1]
    r1 = jnp.where(s1 > 0, jax.lax.rsqrt(s1), 0.0)                            # [M,1]
    r2 = jnp.where(s2 > 0, jax.lax.rsqrt(s2), 0.0).T                          # [1,N]

    # ---- per-generation VMEM budget -----------------------------------------
    # v5e/v6e: 128 MiB physical -> ~96 MiB scoped limit, ~88 MiB tile budget.
    # v7x:      64 MiB physical -> ~48 MiB scoped limit, ~40 MiB tile budget.
    try:
        vmem_cap = int(pltpu.get_tpu_info().vmem_capacity_bytes)
    except Exception:
        vmem_cap = 64 * 1024 * 1024          # conservative fallback (v7x-sized)
    vmem_limit = min(vmem_cap,
                     max(32 << 20, min(int(vmem_cap * 0.75), vmem_cap - (16 << 20))))
    budget = max(vmem_limit - (8 << 20), 12 << 20)

    # ---- tile sizing ---------------------------------------------------------
    if tm is None:
        tm = 512 if in_itemsize >= 4 else 1024   # reuse factor for streamed x2 slab
    tm_e = _pick_tile(M, tm, 8)        # sublane multiple, balanced over M
    tn_e = _pick_tile(N, tn, 128)      # lane-dense output stores

    # v7x has 2 TensorCores: make sure the parallel grid has >= 2 steps so both
    # get work (one extra ~0.35us step on 1-TC chips, irrelevant).
    while _cdiv(M, tm_e) * _cdiv(N, tn_e) < 2:
        if tm_e >= tn_e and tm_e > 8:
            tm_e = _round_up(tm_e // 2, 8)
        elif tn_e > 128:
            tn_e = max(128, _round_up(tn_e // 2, 128))
        elif tm_e > 8:
            tm_e = _round_up(tm_e // 2, 8)
        else:
            break

    Mp = _round_up(M, tm_e)
    Np = _round_up(N, tn_e)
    Dp = _round_up(D, 128)

    # Fixed per-step VMEM: double-buffered output tile, possible f32 accumulator,
    # double-buffered (8,128)-tiled r1/r2 blocks.
    fixed = 2 * tm_e * tn_e * out_itemsize
    fixed += tm_e * tn_e * 4
    fixed += 2 * (tm_e * 128 + 8 * tn_e) * 4

    if tk is not None:
        tk_e = min(_round_up(int(tk), 128), Dp)
    else:
        tk_e = Dp
        # Keep the full-D 2-D path whenever the double-buffered slabs fit the
        # generation budget; otherwise halve the K tile (3-D fallback).
        while tk_e > 128 and (2 * (tm_e + tn_e) * tk_e * in_itemsize + fixed) > budget:
            tk_e = max(128, _round_up(tk_e // 2, 128))

    k_tiled = tk_e < Dp
    if k_tiled:
        Dp = _round_up(Dp, tk_e)

    # ---- zero padding (exact for dot products; padded rows/cols sliced off) --
    x1p = x1.astype(mm_dtype)
    x2p = x2.astype(mm_dtype)
    if Mp != M or Dp != D:
        x1p = jnp.pad(x1p, ((0, Mp - M), (0, Dp - D)))
    if Np != N or Dp != D:
        x2p = jnp.pad(x2p, ((0, Np - N), (0, Dp - D)))
    r1p = r1 if Mp == M else jnp.pad(r1, ((0, Mp - M), (0, 0)))
    r2p = r2 if Np == N else jnp.pad(r2, ((0, 0), (0, Np - N)))

    # Honest streaming cost: x2 re-read once per LHS row block (plus x1 re-reads
    # per column block on the K-tiled path), one output write.
    if not k_tiled:
        bytes_accessed = (Mp * Dp + (Mp // tm_e) * Np * Dp) * in_itemsize \
                         + Mp * Np * out_itemsize
    else:
        bytes_accessed = ((Np // tn_e) * Mp * Dp + (Mp // tm_e) * Np * Dp) * in_itemsize \
                         + Mp * Np * out_itemsize
    cost = pl.CostEstimate(flops=2 * Mp * Np * Dp, transcendentals=0,
                           bytes_accessed=bytes_accessed)

    if not k_tiled:
        grid = (Mp // tm_e, Np // tn_e)
        kernel = _cos_kernel_2d
        in_specs = [
            pl.BlockSpec((tm_e, Dp), lambda i, j: (i, 0)),   # x1 slab (full D)
            pl.BlockSpec((tn_e, Dp), lambda i, j: (j, 0)),   # x2 slab (full D)
            pl.BlockSpec((tm_e, 1), lambda i, j: (i, 0)),    # inv-norm of x1 rows
            pl.BlockSpec((1, tn_e), lambda i, j: (0, j)),    # inv-norm of x2 rows
        ]
        out_specs = pl.BlockSpec((tm_e, tn_e), lambda i, j: (i, j))
        scratch_shapes = []
        dims = ("parallel", "parallel")
    else:
        acc_in_out = (jnp.dtype(out_dtype) == jnp.dtype(jnp.float32))
        grid = (Mp // tm_e, Np // tn_e, Dp // tk_e)
        kernel = _make_cos_kernel_3d(acc_in_out)
        in_specs = [
            pl.BlockSpec((tm_e, tk_e), lambda i, j, k: (i, k)),
            pl.BlockSpec((tn_e, tk_e), lambda i, j, k: (j, k)),
            pl.BlockSpec((tm_e, 1), lambda i, j, k: (i, 0)),
            pl.BlockSpec((1, tn_e), lambda i, j, k: (0, j)),
        ]
        out_specs = pl.BlockSpec((tm_e, tn_e), lambda i, j, k: (i, j))
        scratch_shapes = [] if acc_in_out else [pltpu.VMEM((tm_e, tn_e), jnp.float32)]
        dims = ("parallel", "parallel", "arbitrary")

    out = pl.pallas_call(
        kernel,
        out_shape=jax.ShapeDtypeStruct((Mp, Np), out_dtype),
        grid_spec=pltpu.PrefetchScalarGridSpec(
            num_scalar_prefetch=0,
            grid=grid,
            in_specs=in_specs,
            out_specs=out_specs,
            scratch_shapes=scratch_shapes,
        ),
        compiler_params=pltpu.CompilerParams(
            dimension_semantics=dims,
            vmem_limit_bytes=int(vmem_limit),
        ),
        cost_estimate=cost,
    )(x1p, x2p, r1p, r2p)

    if Mp != M or Np != N:
        out = out[:M, :N]
    return out


def _reference(x1, x2):
    x = x1 @ x2.T
    n1 = jnp.linalg.norm(x1, axis=1)[:, None]
    n2 = jnp.linalg.norm(x2, axis=1)[None, :]
    out = x * (1.0 / (n1 @ n2))
    return jnp.where(jnp.isnan(out), jnp.zeros_like(out), out)


if __name__ == "__main__":
    key = jax.random.PRNGKey(0)
    k1, k2 = jax.random.split(key)

    # Test 1: aligned shapes -> full-D 2-D path (also exercises the >=2 parallel
    # tile split for v7x's dual TensorCores).
    M, N, D = 256, 256, 256
    x1 = jax.random.normal(k1, (M, D), dtype=jnp.float32)
    x2 = jax.random.normal(k2, (N, D), dtype=jnp.float32)
    x1 = x1.at[3].set(0.0)   # exercise NaN -> 0 path (zero-norm row)
    x2 = x2.at[7].set(0.0)

    out = jax.block_until_ready(cosine_similarity(x1, x2))
    ref = _reference(x1, x2)
    assert out.shape == (M, N)
    assert jnp.allclose(out, ref, atol=5e-5, rtol=5e-5), "mismatch vs reference (2-D path)"

    # Test 2: ragged shapes + forced K tiling -> padding + 3-D accumulator path.
    M2, N2, D2 = 200, 120, 384
    y1 = jax.random.normal(k1, (M2, D2), dtype=jnp.float32)
    y2 = jax.random.normal(k2, (N2, D2), dtype=jnp.float32)
    out2 = jax.block_until_ready(cosine_similarity(y1, y2, tk=128))
    ref2 = _reference(y1, y2)
    assert out2.shape == (M2, N2)
    assert jnp.allclose(out2, ref2, atol=5e-5, rtol=5e-5), "mismatch vs reference (3-D path)"

    # Test 3: optional bf16-MXU fast path (f32 accumulation), loose tolerance.
    out3 = jax.block_until_ready(cosine_similarity(x1, x2, matmul_dtype=jnp.bfloat16))
    assert out3.shape == (M, N)
    assert jnp.allclose(out3, ref, atol=5e-2, rtol=5e-2), "mismatch vs reference (bf16 path)"

    print("KERNEL_OK")
</pallas_src>

<mosaic_0001>
module attributes {stable_mosaic.version = 11 : i64} {
  func.func @_cos_kernel_2d(%arg0: i32, %arg1: i32, %arg2: memref<128x256xf32, #tpu.memory_space<vmem>>, %arg3: memref<256x256xf32, #tpu.memory_space<vmem>>, %arg4: memref<128x1xf32, #tpu.memory_space<vmem>>, %arg5: memref<1x256xf32, #tpu.memory_space<vmem>>, %arg6: memref<128x256xf32, #tpu.memory_space<vmem>>) attributes {dimension_semantics = [#tpu.dimension_semantics<parallel>, #tpu.dimension_semantics<parallel>], iteration_bounds = array<i64: 2, 1>, scalar_prefetch = 0 : i64, scratch_operands = 0 : i64, tpu.core_type = #tpu.core_type<tc>, window_params = [{transform_indices = @transform_0, window_bounds = array<i64: 128, 256>}, {transform_indices = @transform_1, window_bounds = array<i64: 256, 256>}, {transform_indices = @transform_2, window_bounds = array<i64: 128, 1>}, {transform_indices = @transform_3, window_bounds = array<i64: 1, 256>}, {transform_indices = @transform_4, window_bounds = array<i64: 128, 256>}]} {
    %c0 = arith.constant 0 : index
    %c0_0 = arith.constant 0 : index
    %0 = vector.load %arg2[%c0, %c0_0] : memref<128x256xf32, #tpu.memory_space<vmem>>, vector<128x256xf32>
    %c0_1 = arith.constant 0 : index
    %c0_2 = arith.constant 0 : index
    %1 = vector.load %arg3[%c0_1, %c0_2] : memref<256x256xf32, #tpu.memory_space<vmem>>, vector<256x256xf32>
    %cst = arith.constant dense<0.000000e+00> : vector<128x256xf32>
    %2 = tpu.matmul %0, %1, %cst {dimension_numbers = #tpu.dot_dimension_numbers<[1], [1], [0], [0], [0, 0, 1, 0], [], []>} : vector<128x256xf32>, vector<256x256xf32>, vector<128x256xf32> -> vector<128x256xf32>
    %c0_3 = arith.constant 0 : index
    %c0_4 = arith.constant 0 : index
    %3 = vector.load %arg4[%c0_3, %c0_4] : memref<128x1xf32, #tpu.memory_space<vmem>>, vector<128x1xf32>
    %4 = vector.broadcast %3 : vector<128x1xf32> to vector<128x256xf32>
    %5 = arith.mulf %2, %4 : vector<128x256xf32>
    %c0_5 = arith.constant 0 : index
    %c0_6 = arith.constant 0 : index
    %6 = vector.load %arg5[%c0_5, %c0_6] : memref<1x256xf32, #tpu.memory_space<vmem>>, vector<1x256xf32>
    %7 = vector.broadcast %6 : vector<1x256xf32> to vector<128x256xf32>
    %8 = arith.mulf %5, %7 : vector<128x256xf32>
    %c0_7 = arith.constant 0 : index
    %c0_8 = arith.constant 0 : index
    %9 = vector.load %arg6[%c0_7, %c0_8] : memref<128x256xf32, #tpu.memory_space<vmem>>, vector<128x256xf32>
    tpu.vector_store %arg6[%c0_7, %c0_8], %8 {strides = array<i32>} : memref<128x256xf32, #tpu.memory_space<vmem>>, vector<128x256xf32>,
    return
  }
  func.func @transform_0(%arg0: i32, %arg1: i32) -> (i32, i32) {
    %c0_i32 = arith.constant 0 : i32
    %c0_i32_0 = arith.constant 0 : i32
    return %arg0, %c0_i32 : i32, i32
  }
  func.func @transform_1(%arg0: i32, %arg1: i32) -> (i32, i32) {
    %c0_i32 = arith.constant 0 : i32
    %c0_i32_0 = arith.constant 0 : i32
    return %arg1, %c0_i32 : i32, i32
  }
  func.func @transform_2(%arg0: i32, %arg1: i32) -> (i32, i32) {
    %c0_i32 = arith.constant 0 : i32
    %c0_i32_0 = arith.constant 0 : i32
    return %arg0, %c0_i32 : i32, i32
  }
  func.func @transform_3(%arg0: i32, %arg1: i32) -> (i32, i32) {
    %c0_i32 = arith.constant 0 : i32
    %c0_i32_0 = arith.constant 0 : i32
    return %c0_i32, %arg1 : i32, i32
  }
  func.func @transform_4(%arg0: i32, %arg1: i32) -> (i32, i32) {
    %c0_i32 = arith.constant 0 : i32
    return %arg0, %arg1 : i32, i32
  }
}

</mosaic_0001>

<llo_original>
// kernel: tpu_custom_call.1
$region0: #{tpu_custom_call.1}
  #allocation0 [shape = 'u32[]', space=smem, size = 0x4, offset = 0x4, fixed_abs, tag = 'smem constant byte address 0x4 - core index']
  #allocation1 [shape = 'u32[144,128]{1,0:T(1,128)}', space=vmem, size = 0x12000, scoped, tag = 'internal scratch']
  %s0 = inlined_call_operand.hbm [shape: f32[256,256], index: 0, kind: input, shape index: {}]
  %s1 = inlined_call_operand.hbm [shape: f32[256,256], index: 1, kind: input, shape index: {}]
  %s2 = inlined_call_operand.vmem [shape: f32[256,1], index: 2, kind: input, shape index: {}]
  %s3 = inlined_call_operand.vmem [shape: f32[1,256], index: 3, kind: input, shape index: {}]
  %s4 = inlined_call_operand.hbm [shape: f32[256,256], index: 4, kind: output, shape index: {}]
  %s5 = sld [smem:[#allocation0]]
  $region57: #{tpu_custom_call.1} parent=0
    _
  %s7 = ssub.s32 1, %s5
  %s8 = scalar_select 0, %s7, %s5
  $region1: #{tpu_custom_call.1} parent=0
    #allocation2 [shape = 'u8[262144]{0}', space=vmem, size = 0x40000, scoped, tag = 'input window, operand 0']
    #allocation3 [shape = 's32[2]{0}', space=sflag, size = 0x8, scoped, tag = 'scoped memory for tpu_custom_call.1']
    #allocation4 [shape = 's32[2]{0}', space=sflag, size = 0x8, scoped, tag = 'scoped memory for tpu_custom_call.1']
    #allocation5 [shape = 'u8[262144]{0}', space=vmem, size = 0x40000, scoped, tag = 'input window, operand 1, single buffered']
    #allocation6 [shape = 's32[1]{0}', space=sflag, size = 0x4, scoped, tag = 'scoped memory for tpu_custom_call.1']
    #allocation7 [shape = 'u8[262144]{0}', space=vmem, size = 0x40000, scoped, tag = 'output window, operand 0']
    %9 = vsyncpa [#allocation3], 0
    %s10 = scalar_lea.sflag [#allocation3], 1
    %11 = vsyncpa %s10, 0
    %12 = vsyncpa [#allocation6], 0
    %13 = vsyncpa [#allocation4], 0
    %s14 = scalar_lea.sflag [#allocation4], 1
    %15 = vsyncpa %s14, 0
    loop: start=0, step=1, limit=4
    $region2: #{tpu_custom_call.1} parent=1 // loop_pre_header
      _
    $region3: #{tpu_custom_call.1} parent=1 // loop_header
      %s17 = sphi 0, %s21
      %p18 = scmp.ge.s32.totalorder %s17, 4
      %s24 = sphi 0, %s36
      %s25 = sphi 0, %s32
      %s26 = sphi 0, %s24
      %s27 = sphi 0, %s25
      %s28 = sphi 0, %s26
      %s29 = sphi 0, %s27
      %s39 = sphi 0, %s41
      %s42 = sphi 0, %s39
      %s43 = sphi 0, %s42
      %s59 = sphi 0, %s43
      %s65 = sphi 0, %s67
      %s68 = sphi 0, %s65
      %s69 = sphi 0, %s68
      %s85 = sphi 0, %s69
      %s91 = sphi 0, %s93
      %s94 = sphi 0, %s91
      %s95 = sphi 0, %s94
      %s111 = sphi 0, %s95
      %s117 = sphi 0, %s119
      %s120 = sphi 0, %s117
      %s121 = sphi 0, %s120
      %s137 = sphi 0, %s121
      %s145 = sphi 0, %s147
      %s148 = sphi 0, %s145
      %s149 = sphi 0, %s148
      %s165 = sphi 0, %s149
    $region4: #{tpu_custom_call.1} parent=1 // loop_header_branch
      %20 = sbr.rel (%p18) target = $region8
    $region5: #{tpu_custom_call.1} parent=1 // loop_body
      %s22 = ssub.s32 %s17, 1
      %s23 = ssub.s32 %s17, 2
      %s30 = sadd.s32 1, %s25
      %p31 = scmp.ge.s32.totalorder %s30, 1
      %s32 = scalar_select %p31, 0, %s30
      %s33 = sadd.s32 1, %s24
      %s34 = scalar_select %p31, %s33, %s24
      %p35 = scmp.ge.s32.totalorder %s34, 2
      %s36 = scalar_select %p35, 0, %s34
      %s37 = ssub.s32 %s24, %s36
      %p38 = scmp.eq.s32.totalorder %s37, 0
      %s40 = sadd.s32 %s39, 1
      %s41 = scalar_select %p38, %s39, %s40
      %p44 = pneg %p38
      %p45 = scmp.eq.s32.totalorder %s17, 1
      %p46 = por %p44, %p45
      %p47 = scmp.ne.s32.totalorder %s39, %s42
      %p48 = scmp.eq.s32.totalorder %s17, 0
      %p49 = por %p47, %p48
      %p50 = scmp.ne.s32.totalorder %s39, %s42
      %p51 = scmp.eq.s32.totalorder %s22, 1
      %p52 = por %p50, %p51
      %p53 = scmp.ne.s32.totalorder %s42, %s43
      %p54 = scmp.eq.s32.totalorder %s22, 0
      %p55 = por %p53, %p54
      %p56 = scmp.ne.s32.totalorder %s42, %s43
      %p57 = scmp.eq.s32.totalorder %s23, 1
      %p58 = por %p56, %p57
      %p60 = scmp.ne.s32.totalorder %s43, %s59
      %p61 = scmp.eq.s32.totalorder %s23, 0
      %p62 = por %p60, %p61
      %s63 = ssub.s32 %s25, %s32
      %p64 = scmp.eq.s32.totalorder %s63, 0
      %s66 = sadd.s32 %s65, 1
      %s67 = scalar_select %p64, %s65, %s66
      %p70 = pneg %p64
      %p71 = scmp.eq.s32.totalorder %s17, 1
      %p72 = por %p70, %p71
      %p73 = scmp.ne.s32.totalorder %s65, %s68
      %p74 = scmp.eq.s32.totalorder %s17, 0
      %p75 = por %p73, %p74
      %p76 = scmp.ne.s32.totalorder %s65, %s68
      %p77 = scmp.eq.s32.totalorder %s22, 1
      %p78 = por %p76, %p77
      %p79 = scmp.ne.s32.totalorder %s68, %s69
      %p80 = scmp.eq.s32.totalorder %s22, 0
      %p81 = por %p79, %p80
      %p82 = scmp.ne.s32.totalorder %s68, %s69
      %p83 = scmp.eq.s32.totalorder %s23, 1
      %p84 = por %p82, %p83
      %p86 = scmp.ne.s32.totalorder %s69, %s85
      %p87 = scmp.eq.s32.totalorder %s23, 0
      %p88 = por %p86, %p87
      %s89 = ssub.s32 %s24, %s36
      %p90 = scmp.eq.s32.totalorder %s89, 0
      %s92 = sadd.s32 %s91, 1
      %s93 = scalar_select %p90, %s91, %s92
      %p96 = pneg %p90
      %p97 = scmp.eq.s32.totalorder %s17, 1
      %p98 = por %p96, %p97
      %p99 = scmp.ne.s32.totalorder %s91, %s94
      %p100 = scmp.eq.s32.totalorder %s17, 0
      %p101 = por %p99, %p100
      %p102 = scmp.ne.s32.totalorder %s91, %s94
      %p103 = scmp.eq.s32.totalorder %s22, 1
      %p104 = por %p102, %p103
      %p105 = scmp.ne.s32.totalorder %s94, %s95
      %p106 = scmp.eq.s32.totalorder %s22, 0
      %p107 = por %p105, %p106
      %p108 = scmp.ne.s32.totalorder %s94, %s95
      %p109 = scmp.eq.s32.totalorder %s23, 1
      %p110 = por %p108, %p109
      %p112 = scmp.ne.s32.totalorder %s95, %s111
      %p113 = scmp.eq.s32.totalorder %s23, 0
      %p114 = por %p112, %p113
      %s115 = ssub.s32 %s25, %s32
      %p116 = scmp.eq.s32.totalorder %s115, 0
      %s118 = sadd.s32 %s117, 1
      %s119 = scalar_select %p116, %s117, %s118
      %p122 = pneg %p116
      %p123 = scmp.eq.s32.totalorder %s17, 1
      %p124 = por %p122, %p123
      %p125 = scmp.ne.s32.totalorder %s117, %s120
      %p126 = scmp.eq.s32.totalorder %s17, 0
      %p127 = por %p125, %p126
      %p128 = scmp.ne.s32.totalorder %s117, %s120
      %p129 = scmp.eq.s32.totalorder %s22, 1
      %p130 = por %p128, %p129
      %p131 = scmp.ne.s32.totalorder %s120, %s121
      %p132 = scmp.eq.s32.totalorder %s22, 0
      %p133 = por %p131, %p132
      %p134 = scmp.ne.s32.totalorder %s120, %s121
      %p135 = scmp.eq.s32.totalorder %s23, 1
      %p136 = por %p134, %p135
      %p138 = scmp.ne.s32.totalorder %s121, %s137
      %p139 = scmp.eq.s32.totalorder %s23, 0
      %p140 = por %p138, %p139
      %s141 = ssub.s32 %s24, %s36
      %s142 = ssub.s32 %s25, %s32
      %s143 = sor.u32 %s141, %s142
      %p144 = scmp.eq.s32.totalorder %s143, 0
      %s146 = sadd.s32 %s145, 1
      %s147 = scalar_select %p144, %s145, %s146
      %p150 = pneg %p144
      %p151 = scmp.eq.s32.totalorder %s17, 1
      %p152 = por %p150, %p151
      %p153 = scmp.ne.s32.totalorder %s145, %s148
      %p154 = scmp.eq.s32.totalorder %s17, 0
      %p155 = por %p153, %p154
      %p156 = scmp.ne.s32.totalorder %s145, %s148
      %p157 = scmp.eq.s32.totalorder %s22, 1
      %p158 = por %p156, %p157
      %p159 = scmp.ne.s32.totalorder %s148, %s149
      %p160 = scmp.eq.s32.totalorder %s22, 0
      %p161 = por %p159, %p160
      %p162 = scmp.ne.s32.totalorder %s148, %s149
      %p163 = scmp.eq.s32.totalorder %s23, 1
      %p164 = por %p162, %p163
      %p166 = scmp.ne.s32.totalorder %s149, %s165
      %p167 = scmp.eq.s32.totalorder %s23, 0
      %p168 = por %p166, %p167
      %p169 = scmp.le.s32.totalorder 1, %s17
      %p170 = scmp.lt.s32.totalorder %s17, 3
      %p171 = pnand %p169, %p170
      %p172 = pneg %p171
      // Predicated region
      $region9: #{tpu_custom_call.1} parent=5 // pred_check
        _
      $region10: #{tpu_custom_call.1} parent=5 // pred_check_branch
        %174 = sbr.rel (%p171) target = $region12
      $region11: #{tpu_custom_call.1} parent=5 // pred_region
        %s175 = ssub.s32 %s17, 1
        // Predicated region
        $region13: #{tpu_custom_call.1} parent=11 // pred_check
          %p176 = pneg %p81
        $region14: #{tpu_custom_call.1} parent=11 // pred_check_branch
          %178 = sbr.rel (%p176) target = $region16
        $region15: #{tpu_custom_call.1} parent=11 // pred_region
          %s179 = smul.u32 32, %s27
          %s181 = ssub.s32 8192, 8192
          %182 = vsyncadd [#allocation6], %s181
          %s183 = smul.addr %s179, 2
          %s184 = smul.addr %s183, 128
          %s185 = scalar_lea.hbm %s1, %s184
          %s186 = sshll.u32 [#allocation5], 4
          %s187 = int_to_ptr.vmem [resolvable:$true] %s186
          %192 = dma.hbm_to_vmem [thread:$0]  %s185, 8192, %s187, [#allocation6], 256, 256, 16
        $region16: #{tpu_custom_call.1} parent=11 // pred_fallthru
          _
        // Predicated region
        $region17: #{tpu_custom_call.1} parent=11 // pred_check
          %p193 = pneg %p133
        $region18: #{tpu_custom_call.1} parent=11 // pred_check_branch
          %195 = sbr.rel (%p193) target = $region20
        $region19: #{tpu_custom_call.1} parent=11 // pred_region
          %s196 = smul.u32 2, %s27
          %p197 = scmp.lt.s32.totalorder %s196, 1
          %s198 = scalar_select %p197, %s196, 1
          %s199 = scalar_lea.vmem %s3, %s198
          %s200 = smul.u32 2, %s27
        $region20: #{tpu_custom_call.1} parent=11 // pred_fallthru
          _
      $region12: #{tpu_custom_call.1} parent=5 // pred_fallthru
        _
      %p201 = scmp.lt.s32.totalorder %s17, 2
      // Predicated region
      $region21: #{tpu_custom_call.1} parent=5 // pred_check
        %p202 = pneg %p201
      $region22: #{tpu_custom_call.1} parent=5 // pred_check_branch
        %204 = sbr.rel (%p202) target = $region24
      $region23: #{tpu_custom_call.1} parent=5 // pred_region
        // Predicated region
        $region25: #{tpu_custom_call.1} parent=23 // pred_check
          %p205 = pneg %p49
        $region26: #{tpu_custom_call.1} parent=23 // pred_check_branch
          %207 = sbr.rel (%p205) target = $region28
        $region27: #{tpu_custom_call.1} parent=23 // pred_region
          %s208 = sand.u32 %s39, 1
          %s209 = scalar_lea.sflag [#allocation3], %s208
          %s210 = sand.u32 %s39, 1
          %s211 = smul.addr %s210, 256
          %s212 = scalar_lea.vmem [#allocation2], %s211
          %s213 = smul.u32 16, %s24
          %s215 = ssub.s32 4096, 4096
          %216 = vsyncadd %s209, %s215
          %s217 = smul.addr %s213, 2
          %s218 = smul.addr %s217, 128
          %s219 = scalar_lea.hbm %s0, %s218
          %s220 = sshll.u32 %s212, 4
          %s221 = int_to_ptr.vmem [resolvable:$true] %s220
          %226 = dma.hbm_to_vmem [thread:$0]  %s219, 4096, %s221, %s209, 256, 256, 16
        $region28: #{tpu_custom_call.1} parent=23 // pred_fallthru
          _
        // Predicated region
        $region29: #{tpu_custom_call.1} parent=23 // pred_check
          %p227 = pneg %p101
        $region30: #{tpu_custom_call.1} parent=23 // pred_check_branch
          %229 = sbr.rel (%p227) target = $region32
        $region31: #{tpu_custom_call.1} parent=23 // pred_region
          %s230 = smul.u32 16, %s24
          %p231 = scmp.lt.s32.totalorder %s230, 31
          %s232 = scalar_select %p231, %s230, 31
          %s233 = smul.addr %s232, 8
          %s234 = scalar_lea.vmem %s2, %s233
          %s235 = smul.u32 16, %s24
        $region32: #{tpu_custom_call.1} parent=23 // pred_fallthru
          _
      $region24: #{tpu_custom_call.1} parent=5 // pred_fallthru
        _
      %p236 = scmp.le.s32.totalorder 1, %s17
      %p237 = scmp.lt.s32.totalorder %s17, 3
      %p238 = pnand %p236, %p237
      %p239 = pneg %p238
      // Predicated region
      $region33: #{tpu_custom_call.1} parent=5 // pred_check
        _
      $region34: #{tpu_custom_call.1} parent=5 // pred_check_branch
        %241 = sbr.rel (%p238) target = $region36
      $region35: #{tpu_custom_call.1} parent=5 // pred_region
        %s242 = ssub.s32 %s17, 1
        %s243 = sand.u32 %s42, 1
        %s244 = scalar_lea.sflag [#allocation3], %s243
        %s245 = sand.u32 %s42, 1
        %s246 = smul.addr %s245, 256
        %s247 = scalar_lea.vmem [#allocation2], %s246
        // Predicated region
        $region37: #{tpu_custom_call.1} parent=35 // pred_check
          %p248 = pneg %p55
        $region38: #{tpu_custom_call.1} parent=35 // pred_check_branch
          %250 = sbr.rel (%p248) target = $region40
        $region39: #{tpu_custom_call.1} parent=35 // pred_region
          %251 = dma.done %s244, 4096
        $region40: #{tpu_custom_call.1} parent=35 // pred_fallthru
          _
        // Predicated region
        $region41: #{tpu_custom_call.1} parent=35 // pred_check
          %p252 = pneg %p81
        $region42: #{tpu_custom_call.1} parent=35 // pred_check_branch
          %254 = sbr.rel (%p252) target = $region44
        $region43: #{tpu_custom_call.1} parent=35 // pred_region
          %255 = dma.done [#allocation6], 8192
        $region44: #{tpu_custom_call.1} parent=35 // pred_fallthru
          _
        %s256 = sand.u32 %s42, 1
        %s257 = scalar_lea.sflag [#allocation3], %s256
        %s258 = sand.u32 %s42, 1
        %s259 = smul.addr %s258, 256
        %s260 = scalar_lea.vmem [#allocation2], %s259
        %p261 = pneg %p55
        %p262 = pneg %p52
        %p263 = pneg %p81
        %p264 = pneg %p78
        %s265 = smul.u32 16, %s26
        %p266 = scmp.lt.s32.totalorder %s265, 31
        %s267 = scalar_select %p266, %s265, 31
        %s268 = smul.addr %s267, 8
        %s269 = scalar_lea.vmem %s2, %s268
        %p270 = pneg %p107
        %p271 = pneg %p104
        %s272 = smul.u32 2, %s27
        %p273 = scmp.lt.s32.totalorder %s272, 1
        %s274 = scalar_select %p273, %s272, 1
        %s275 = scalar_lea.vmem %s3, %s274
        %p276 = pneg %p133
        %p277 = pneg %p130
        %p278 = pneg %p161
        %p279 = pneg %p158
        %s280 = sand.u32 %s148, 1
        %s281 = scalar_lea.sflag [#allocation4], %s280
        %s282 = sand.u32 %s148, 1
        %s283 = smul.addr %s282, 256
        %s284 = scalar_lea.vmem [#allocation7], %s283
        %s285 = smul.u32 16, %s26
        %s286 = smul.u32 32, %s27
        %s287 = smul.u32 16, %s26
        %p288 = scmp.lt.s32.totalorder %s287, 31
        %s289 = scalar_select %p288, %s287, 31
        %s290 = smul.addr %s289, 8
        %s291 = scalar_lea.vmem %s2, %s290
        %s292 = smul.u32 16, %s26
        %s293 = smul.u32 2, %s27
        %p294 = scmp.lt.s32.totalorder %s293, 1
        %s295 = scalar_select %p294, %s293, 1
        %s296 = scalar_lea.vmem %s3, %s295
        %s297 = smul.u32 2, %s27
        %s298 = smul.u32 16, %s26
        %s299 = smul.u32 2, %s27
        %v300 = vld [vmem:[%s247] sm:$0xff]
        %v301 = vld [vmem:[%s247 + $0x8] sm:$0xff]
        %v302 = vld [vmem:[%s247 + $0x10] sm:$0xff]
        %v303 = vld [vmem:[%s247 + $0x18] sm:$0xff]
        %v304 = vld [vmem:[%s247 + $0x20] sm:$0xff]
        %v305 = vld [vmem:[%s247 + $0x28] sm:$0xff]
        %v306 = vld [vmem:[%s247 + $0x30] sm:$0xff]
        %v307 = vld [vmem:[%s247 + $0x38] sm:$0xff]
        %v308 = vld [vmem:[%s247 + $0x40] sm:$0xff]
        %v309 = vld [vmem:[%s247 + $0x48] sm:$0xff]
        %v310 = vld [vmem:[%s247 + $0x50] sm:$0xff]
        %v311 = vld [vmem:[%s247 + $0x58] sm:$0xff]
        %v312 = vld [vmem:[%s247 + $0x60] sm:$0xff]
        %v313 = vld [vmem:[%s247 + $0x68] sm:$0xff]
        %v314 = vld [vmem:[%s247 + $0x70] sm:$0xff]
        %v315 = vld [vmem:[%s247 + $0x78] sm:$0xff]
        %v316 = vld [vmem:[%s247 + $0x80] sm:$0xff]
        %v317 = vld [vmem:[%s247 + $0x88] sm:$0xff]
        %v318 = vld [vmem:[%s247 + $0x90] sm:$0xff]
        %v319 = vld [vmem:[%s247 + $0x98] sm:$0xff]
        %v320 = vld [vmem:[%s247 + $0xa0] sm:$0xff]
        %v321 = vld [vmem:[%s247 + $0xa8] sm:$0xff]
        %v322 = vld [vmem:[%s247 + $0xb0] sm:$0xff]
        %v323 = vld [vmem:[%s247 + $0xb8] sm:$0xff]
        %v324 = vld [vmem:[%s247 + $0xc0] sm:$0xff]
        %v325 = vld [vmem:[%s247 + $0xc8] sm:$0xff]
        %v326 = vld [vmem:[%s247 + $0xd0] sm:$0xff]
        %v327 = vld [vmem:[%s247 + $0xd8] sm:$0xff]
        %v328 = vld [vmem:[%s247 + $0xe0] sm:$0xff]
        %v329 = vld [vmem:[%s247 + $0xe8] sm:$0xff]
        %v330 = vld [vmem:[%s247 + $0xf0] sm:$0xff]
        %v331 = vld [vmem:[%s247 + $0xf8] sm:$0xff]
        %v332 = vld [vmem:[#allocation5] sm:$0xff]
        %v333 = vld [vmem:[#allocation5 + $0x8] sm:$0xff]
        %v334 = vld [vmem:[#allocation5 + $0x10] sm:$0xff]
        %v335 = vld [vmem:[#allocation5 + $0x18] sm:$0xff]
        %v336 = vld [vmem:[#allocation5 + $0x20] sm:$0xff]
        %v337 = vld [vmem:[#allocation5 + $0x28] sm:$0xff]
        %v338 = vld [vmem:[#allocation5 + $0x30] sm:$0xff]
        %v339 = vld [vmem:[#allocation5 + $0x38] sm:$0xff]
        %v340 = vld [vmem:[#allocation5 + $0x40] sm:$0xff]
        %v341 = vld [vmem:[#allocation5 + $0x48] sm:$0xff]
        %v342 = vld [vmem:[#allocation5 + $0x50] sm:$0xff]
        %v343 = vld [vmem:[#allocation5 + $0x58] sm:$0xff]
        %v344 = vld [vmem:[#allocation5 + $0x60] sm:$0xff]
        %v345 = vld [vmem:[#allocation5 + $0x68] sm:$0xff]
        %v346 = vld [vmem:[#allocation5 + $0x70] sm:$0xff]
        %v347 = vld [vmem:[#allocation5 + $0x78] sm:$0xff]
        %v348 = vld [vmem:[#allocation5 + $0x80] sm:$0xff]
        %v349 = vld [vmem:[#allocation5 + $0x88] sm:$0xff]
        %v350 = vld [vmem:[#allocation5 + $0x90] sm:$0xff]
        %v351 = vld [vmem:[#allocation5 + $0x98] sm:$0xff]
        %v352 = vld [vmem:[#allocation5 + $0xa0] sm:$0xff]
        %v353 = vld [vmem:[#allocation5 + $0xa8] sm:$0xff]
        %v354 = vld [vmem:[#allocation5 + $0xb0] sm:$0xff]
        %v355 = vld [vmem:[#allocation5 + $0xb8] sm:$0xff]
        %v356 = vld [vmem:[#allocation5 + $0xc0] sm:$0xff]
        %v357 = vld [vmem:[#allocation5 + $0xc8] sm:$0xff]
        %v358 = vld [vmem:[#allocation5 + $0xd0] sm:$0xff]
        %v359 = vld [vmem:[#allocation5 + $0xd8] sm:$0xff]
        %v360 = vld [vmem:[#allocation5 + $0xe0] sm:$0xff]
        %v361 = vld [vmem:[#allocation5 + $0xe8] sm:$0xff]
        %v362 = vld [vmem:[#allocation5 + $0xf0] sm:$0xff]
        %v363 = vld [vmem:[#allocation5 + $0xf8] sm:$0xff]
        %v364 = vld [vmem:[#allocation5 + $0x100] sm:$0xff]
        %v365 = vld [vmem:[#allocation5 + $0x108] sm:$0xff]
        %v366 = vld [vmem:[#allocation5 + $0x110] sm:$0xff]
        %v367 = vld [vmem:[#allocation5 + $0x118] sm:$0xff]
        %v368 = vld [vmem:[#allocation5 + $0x120] sm:$0xff]
        %v369 = vld [vmem:[#allocation5 + $0x128] sm:$0xff]
        %v370 = vld [vmem:[#allocation5 + $0x130] sm:$0xff]
        %v371 = vld [vmem:[#allocation5 + $0x138] sm:$0xff]
        %v372 = vld [vmem:[#allocation5 + $0x140] sm:$0xff]
        %v373 = vld [vmem:[#allocation5 + $0x148] sm:$0xff]
        %v374 = vld [vmem:[#allocation5 + $0x150] sm:$0xff]
        %v375 = vld [vmem:[#allocation5 + $0x158] sm:$0xff]
        %v376 = vld [vmem:[#allocation5 + $0x160] sm:$0xff]
        %v377 = vld [vmem:[#allocation5 + $0x168] sm:$0xff]
        %v378 = vld [vmem:[#allocation5 + $0x170] sm:$0xff]
        %v379 = vld [vmem:[#allocation5 + $0x178] sm:$0xff]
        %v380 = vld [vmem:[#allocation5 + $0x180] sm:$0xff]
        %v381 = vld [vmem:[#allocation5 + $0x188] sm:$0xff]
        %v382 = vld [vmem:[#allocation5 + $0x190] sm:$0xff]
        %v383 = vld [vmem:[#allocation5 + $0x198] sm:$0xff]
        %v384 = vld [vmem:[#allocation5 + $0x1a0] sm:$0xff]
        %v385 = vld [vmem:[#allocation5 + $0x1a8] sm:$0xff]
        %v386 = vld [vmem:[#allocation5 + $0x1b0] sm:$0xff]
        %v387 = vld [vmem:[#allocation5 + $0x1b8] sm:$0xff]
        %v388 = vld [vmem:[#allocation5 + $0x1c0] sm:$0xff]
        %v389 = vld [vmem:[#allocation5 + $0x1c8] sm:$0xff]
        %v390 = vld [vmem:[#allocation5 + $0x1d0] sm:$0xff]
        %v391 = vld [vmem:[#allocation5 + $0x1d8] sm:$0xff]
        %v392 = vld [vmem:[#allocation5 + $0x1e0] sm:$0xff]
        %v393 = vld [vmem:[#allocation5 + $0x1e8] sm:$0xff]
        %v394 = vld [vmem:[#allocation5 + $0x1f0] sm:$0xff]
        %v395 = vld [vmem:[#allocation5 + $0x1f8] sm:$0xff]
        %396 = vmatprep.subr.mxu0 %v363
        %397 = vmatpush1.xpose.msra.mxu0 %v362
        %398 = vmatprep.subr.mxu0 %v361
        %399 = vmatpush1.xpose.msra.mxu0 %v360
        %400 = vmatprep.subr.mxu0 %v359
        %401 = vmatpush1.xpose.msra.mxu0 %v358
        %402 = vmatprep.subr.mxu0 %v357
        %403 = vmatpush1.xpose.msra.mxu0 %v356
        %404 = vmatprep.subr.mxu0 %v355
        %405 = vmatpush1.xpose.msra.mxu0 %v354
        %406 = vmatprep.subr.mxu0 %v353
        %407 = vmatpush1.xpose.msra.mxu0 %v352
        %408 = vmatprep.subr.mxu0 %v351
        %409 = vmatpush1.xpose.msra.mxu0 %v350
        %410 = vmatprep.subr.mxu0 %v349
        %411 = vmatpush1.xpose.msra.mxu0 %v348
        %412 = vmatprep.subr.mxu0 %v347
        %413 = vmatpush1.xpose.msra.mxu0 %v346
        %414 = vmatprep.subr.mxu0 %v345
        %415 = vmatpush1.xpose.msra.mxu0 %v344
        %416 = vmatprep.subr.mxu0 %v343
        %417 = vmatpush1.xpose.msra.mxu0 %v342
        %418 = vmatprep.subr.mxu0 %v341
        %419 = vmatpush1.xpose.msra.mxu0 %v340
        %420 = vmatprep.subr.mxu0 %v339
        %421 = vmatpush1.xpose.msra.mxu0 %v338
        %422 = vmatprep.subr.mxu0 %v337
        %423 = vmatpush1.xpose.msra.mxu0 %v336
        %424 = vmatprep.subr.mxu0 %v335
        %425 = vmatpush1.xpose.msra.mxu0 %v334
        %426 = vmatprep.subr.mxu0 %v333
        %427 = vmatpush1.xpose.msra.mxu0 %v332
        %428 = vmatprep.subr.mxu0 %v395
        %429 = vmatpush2.xpose.msra.mxu0 %v394
        %430 = vmatprep.subr.mxu0 %v393
        %431 = vmatpush2.xpose.msra.mxu0 %v392
        %432 = vmatprep.subr.mxu0 %v391
        %433 = vmatpush2.xpose.msra.mxu0 %v390
        %434 = vmatprep.subr.mxu0 %v389
        %435 = vmatpush2.xpose.msra.mxu0 %v388
        %436 = vmatprep.subr.mxu0 %v387
        %437 = vmatpush2.xpose.msra.mxu0 %v386
        %438 = vmatprep.subr.mxu0 %v385
        %439 = vmatpush2.xpose.msra.mxu0 %v384
        %440 = vmatprep.subr.mxu0 %v383
        %441 = vmatpush2.xpose.msra.mxu0 %v382
        %442 = vmatprep.subr.mxu0 %v381
        %443 = vmatpush2.xpose.msra.mxu0 %v380
        %444 = vmatprep.subr.mxu0 %v379
        %445 = vmatpush2.xpose.msra.mxu0 %v378
        %446 = vmatprep.subr.mxu0 %v377
        %447 = vmatpush2.xpose.msra.mxu0 %v376
        %448 = vmatprep.subr.mxu0 %v375
        %449 = vmatpush2.xpose.msra.mxu0 %v374
        %450 = vmatprep.subr.mxu0 %v373
        %451 = vmatpush2.xpose.msra.mxu0 %v372
        %452 = vmatprep.subr.mxu0 %v371
        %453 = vmatpush2.xpose.msra.mxu0 %v370
        %454 = vmatprep.subr.mxu0 %v369
        %455 = vmatpush2.xpose.msra.mxu0 %v368
        %456 = vmatprep.subr.mxu0 %v367
        %457 = vmatpush2.xpose.msra.mxu0 %v366
        %458 = vmatprep.subr.mxu0 %v365
        %459 = vmatpush2.xpose.msra.mxu0 %v364
        %460 = vmatprep.mubr.f32.mxu0 %v301
        %461 = vmatmul.mubr.f32.gmra.mxu0 %v300
        %v462 = vpop.f32.mrf.mxu0
        %v463 = vadd.f32 0.0, %v462
        %v464 = vpop.f32.mrf.mxu0
        %v465 = vadd.f32 0.0, %v464
        %466 = vmatprep.mubr.f32.mxu0 %v303
        %467 = vmatmul.mubr.f32.gmra.mxu0 %v302
        %v468 = vpop.f32.mrf.mxu0
        %v469 = vadd.f32 0.0, %v468
        %v470 = vpop.f32.mrf.mxu0
        %v471 = vadd.f32 0.0, %v470
        %472 = vmatprep.mubr.f32.mxu0 %v305
        %473 = vmatmul.mubr.f32.gmra.mxu0 %v304
        %v474 = vpop.f32.mrf.mxu0
        %v475 = vadd.f32 0.0, %v474
        %v476 = vpop.f32.mrf.mxu0
        %v477 = vadd.f32 0.0, %v476
        %478 = vmatprep.mubr.f32.mxu0 %v307
        %479 = vmatmul.mubr.f32.gmra.mxu0 %v306
        %v480 = vpop.f32.mrf.mxu0
        %v481 = vadd.f32 0.0, %v480
        %v482 = vpop.f32.mrf.mxu0
        %v483 = vadd.f32 0.0, %v482
        %484 = vmatprep.mubr.f32.mxu0 %v309
        %485 = vmatmul.mubr.f32.gmra.mxu0 %v308
        %v486 = vpop.f32.mrf.mxu0
        %v487 = vadd.f32 0.0, %v486
        %v488 = vpop.f32.mrf.mxu0
        %v489 = vadd.f32 0.0, %v488
        %490 = vmatprep.mubr.f32.mxu0 %v311
        %491 = vmatmul.mubr.f32.gmra.mxu0 %v310
        %v492 = vpop.f32.mrf.mxu0
        %v493 = vadd.f32 0.0, %v492
        %v494 = vpop.f32.mrf.mxu0
        %v495 = vadd.f32 0.0, %v494
        %496 = vmatprep.mubr.f32.mxu0 %v313
        %497 = vmatmul.mubr.f32.gmra.mxu0 %v312
        %v498 = vpop.f32.mrf.mxu0
        %v499 = vadd.f32 0.0, %v498
        %v500 = vpop.f32.mrf.mxu0
        %v501 = vadd.f32 0.0, %v500
        %502 = vmatprep.mubr.f32.mxu0 %v315
        %503 = vmatmul.mubr.f32.gmra.mxu0 %v314
        %v504 = vpop.f32.mrf.mxu0
        %v505 = vadd.f32 0.0, %v504
        %v506 = vpop.f32.mrf.mxu0
        %v507 = vadd.f32 0.0, %v506
        %508 = vmatprep.mubr.f32.mxu0 %v317
        %509 = vmatmul.mubr.f32.gmra.mxu0 %v316
        %v510 = vpop.f32.mrf.mxu0
        %v511 = vadd.f32 0.0, %v510
        %v512 = vpop.f32.mrf.mxu0
        %v513 = vadd.f32 0.0, %v512
        %514 = vmatprep.mubr.f32.mxu0 %v319
        %515 = vmatmul.mubr.f32.gmra.mxu0 %v318
        %v516 = vpop.f32.mrf.mxu0
        %v517 = vadd.f32 0.0, %v516
        %v518 = vpop.f32.mrf.mxu0
        %v519 = vadd.f32 0.0, %v518
        %520 = vmatprep.mubr.f32.mxu0 %v321
        %521 = vmatmul.mubr.f32.gmra.mxu0 %v320
        %v522 = vpop.f32.mrf.mxu0
        %v523 = vadd.f32 0.0, %v522
        %v524 = vpop.f32.mrf.mxu0
        %v525 = vadd.f32 0.0, %v524
        %526 = vmatprep.mubr.f32.mxu0 %v323
        %527 = vmatmul.mubr.f32.gmra.mxu0 %v322
        %v528 = vpop.f32.mrf.mxu0
        %v529 = vadd.f32 0.0, %v528
        %v530 = vpop.f32.mrf.mxu0
        %v531 = vadd.f32 0.0, %v530
        %532 = vmatprep.mubr.f32.mxu0 %v325
        %533 = vmatmul.mubr.f32.gmra.mxu0 %v324
        %v534 = vpop.f32.mrf.mxu0
        %v535 = vadd.f32 0.0, %v534
        %v536 = vpop.f32.mrf.mxu0
        %v537 = vadd.f32 0.0, %v536
        %538 = vmatprep.mubr.f32.mxu0 %v327
        %539 = vmatmul.mubr.f32.gmra.mxu0 %v326
        %v540 = vpop.f32.mrf.mxu0
        %v541 = vadd.f32 0.0, %v540
        %v542 = vpop.f32.mrf.mxu0
        %v543 = vadd.f32 0.0, %v542
        %544 = vmatprep.mubr.f32.mxu0 %v329
        %545 = vmatmul.mubr.f32.gmra.mxu0 %v328
        %v546 = vpop.f32.mrf.mxu0
        %v547 = vadd.f32 0.0, %v546
        %v548 = vpop.f32.mrf.mxu0
        %v549 = vadd.f32 0.0, %v548
        %550 = vmatprep.mubr.f32.mxu0 %v331
        %551 = vmatmul.mubr.f32.gmra.mxu0 %v330
        %v552 = vpop.f32.mrf.mxu0
        %v553 = vadd.f32 0.0, %v552
        %v554 = vpop.f32.mrf.mxu0
        %v555 = vadd.f32 0.0, %v554
        %556 = vdwg.mxu0
        %v557 = vld [vmem:[%s291] sm:$0xff]
        %v558 = vld [vmem:[%s291 + $0x8] sm:$0xff]
        %v559 = vld [vmem:[%s291 + $0x10] sm:$0xff]
        %v560 = vld [vmem:[%s291 + $0x18] sm:$0xff]
        %v561 = vld [vmem:[%s291 + $0x20] sm:$0xff]
        %v562 = vld [vmem:[%s291 + $0x28] sm:$0xff]
        %v563 = vld [vmem:[%s291 + $0x30] sm:$0xff]
        %v564 = vld [vmem:[%s291 + $0x38] sm:$0xff]
        %v565 = vld [vmem:[%s291 + $0x40] sm:$0xff]
        %v566 = vld [vmem:[%s291 + $0x48] sm:$0xff]
        %v567 = vld [vmem:[%s291 + $0x50] sm:$0xff]
        %v568 = vld [vmem:[%s291 + $0x58] sm:$0xff]
        %v569 = vld [vmem:[%s291 + $0x60] sm:$0xff]
        %v570 = vld [vmem:[%s291 + $0x68] sm:$0xff]
        %v571 = vld [vmem:[%s291 + $0x70] sm:$0xff]
        %v572 = vld [vmem:[%s291 + $0x78] sm:$0xff]
        %574 = vset.pattern.permute.xlu0 0
        %575 = vperm.xlu0 %574, %v557
        %v576 = vpop.permute.xlu0 %575
        %579 = vset.pattern.permute.xlu0 0
        %580 = vperm.xlu0 %579, %v558
        %v581 = vpop.permute.xlu0 %580
        %584 = vset.pattern.permute.xlu0 0
        %585 = vperm.xlu0 %584, %v559
        %v586 = vpop.permute.xlu0 %585
        %589 = vset.pattern.permute.xlu0 0
        %590 = vperm.xlu0 %589, %v560
        %v591 = vpop.permute.xlu0 %590
        %594 = vset.pattern.permute.xlu0 0
        %595 = vperm.xlu0 %594, %v561
        %v596 = vpop.permute.xlu0 %595
        %599 = vset.pattern.permute.xlu0 0
        %600 = vperm.xlu0 %599, %v562
        %v601 = vpop.permute.xlu0 %600
        %604 = vset.pattern.permute.xlu0 0
        %605 = vperm.xlu0 %604, %v563
        %v606 = vpop.permute.xlu0 %605
        %609 = vset.pattern.permute.xlu0 0
        %610 = vperm.xlu0 %609, %v564
        %v611 = vpop.permute.xlu0 %610
        %614 = vset.pattern.permute.xlu0 0
        %615 = vperm.xlu0 %614, %v565
        %v616 = vpop.permute.xlu0 %615
        %619 = vset.pattern.permute.xlu0 0
        %620 = vperm.xlu0 %619, %v566
        %v621 = vpop.permute.xlu0 %620
        %624 = vset.pattern.permute.xlu0 0
        %625 = vperm.xlu0 %624, %v567
        %v626 = vpop.permute.xlu0 %625
        %629 = vset.pattern.permute.xlu0 0
        %630 = vperm.xlu0 %629, %v568
        %v631 = vpop.permute.xlu0 %630
        %634 = vset.pattern.permute.xlu0 0
        %635 = vperm.xlu0 %634, %v569
        %v636 = vpop.permute.xlu0 %635
        %639 = vset.pattern.permute.xlu0 0
        %640 = vperm.xlu0 %639, %v570
        %v641 = vpop.permute.xlu0 %640
        %644 = vset.pattern.permute.xlu0 0
        %645 = vperm.xlu0 %644, %v571
        %v646 = vpop.permute.xlu0 %645
        %649 = vset.pattern.permute.xlu0 0
        %650 = vperm.xlu0 %649, %v572
        %v651 = vpop.permute.xlu0 %650
        %v653 = vmul.f32 %v463, %v576
        %v654 = vmul.f32 %v465, %v576
        %v655 = vmul.f32 %v469, %v581
        %v656 = vmul.f32 %v471, %v581
        %v657 = vmul.f32 %v475, %v586
        %v658 = vmul.f32 %v477, %v586
        %v659 = vmul.f32 %v481, %v591
        %v660 = vmul.f32 %v483, %v591
        %v661 = vmul.f32 %v487, %v596
        %v662 = vmul.f32 %v489, %v596
        %v663 = vmul.f32 %v493, %v601
        %v664 = vmul.f32 %v495, %v601
        %v665 = vmul.f32 %v499, %v606
        %v666 = vmul.f32 %v501, %v606
        %v667 = vmul.f32 %v505, %v611
        %v668 = vmul.f32 %v507, %v611
        %v669 = vmul.f32 %v511, %v616
        %v670 = vmul.f32 %v513, %v616
        %v671 = vmul.f32 %v517, %v621
        %v672 = vmul.f32 %v519, %v621
        %v673 = vmul.f32 %v523, %v626
        %v674 = vmul.f32 %v525, %v626
        %v675 = vmul.f32 %v529, %v631
        %v676 = vmul.f32 %v531, %v631
        %v677 = vmul.f32 %v535, %v636
        %v678 = vmul.f32 %v537, %v636
        %v679 = vmul.f32 %v541, %v641
        %v680 = vmul.f32 %v543, %v641
        %v681 = vmul.f32 %v547, %v646
        %v682 = vmul.f32 %v549, %v646
        %v683 = vmul.f32 %v553, %v651
        %v684 = vmul.f32 %v555, %v651
        %v685 = vld [vmem:[%s296] sm:$0x3]
        %v687 = vlaneseq
        %v688 = vshrl.u32 %v687, 7
        %v689 = vsub.s32 0, %v688
        %v690 = vrot.slane %v685, %v689
        %v691 = vlaneseq
        %v692 = vshrl.u32 %v691, 7
        %v693 = vsub.s32 1, %v692
        %v694 = vrot.slane %v685, %v693
        %v697 = vmul.f32 %v653, %v690
        %v698 = vmul.f32 %v654, %v694
        %v699 = vmul.f32 %v655, %v690
        %v700 = vmul.f32 %v656, %v694
        %v701 = vmul.f32 %v657, %v690
        %v702 = vmul.f32 %v658, %v694
        %v703 = vmul.f32 %v659, %v690
        %v704 = vmul.f32 %v660, %v694
        %v705 = vmul.f32 %v661, %v690
        %v706 = vmul.f32 %v662, %v694
        %v707 = vmul.f32 %v663, %v690
        %v708 = vmul.f32 %v664, %v694
        %v709 = vmul.f32 %v665, %v690
        %v710 = vmul.f32 %v666, %v694
        %v711 = vmul.f32 %v667, %v690
        %v712 = vmul.f32 %v668, %v694
        %v713 = vmul.f32 %v669, %v690
        %v714 = vmul.f32 %v670, %v694
        %v715 = vmul.f32 %v671, %v690
        %v716 = vmul.f32 %v672, %v694
        %v717 = vmul.f32 %v673, %v690
        %v718 = vmul.f32 %v674, %v694
        %v719 = vmul.f32 %v675, %v690
        %v720 = vmul.f32 %v676, %v694
        %v721 = vmul.f32 %v677, %v690
        %v722 = vmul.f32 %v678, %v694
        %v723 = vmul.f32 %v679, %v690
        %v724 = vmul.f32 %v680, %v694
        %v725 = vmul.f32 %v681, %v690
        %v726 = vmul.f32 %v682, %v694
        %v727 = vmul.f32 %v683, %v690
        %v728 = vmul.f32 %v684, %v694
        %729 = vst [vmem:[%s284] sm:$0xff] %v697
        %730 = vst [vmem:[%s284 + $0x8] sm:$0xff] %v698
        %731 = vst [vmem:[%s284 + $0x10] sm:$0xff] %v699
        %732 = vst [vmem:[%s284 + $0x18] sm:$0xff] %v700
        %733 = vst [vmem:[%s284 + $0x20] sm:$0xff] %v701
        %734 = vst [vmem:[%s284 + $0x28] sm:$0xff] %v702
        %735 = vst [vmem:[%s284 + $0x30] sm:$0xff] %v703
        %736 = vst [vmem:[%s284 + $0x38] sm:$0xff] %v704
        %737 = vst [vmem:[%s284 + $0x40] sm:$0xff] %v705
        %738 = vst [vmem:[%s284 + $0x48] sm:$0xff] %v706
        %739 = vst [vmem:[%s284 + $0x50] sm:$0xff] %v707
        %740 = vst [vmem:[%s284 + $0x58] sm:$0xff] %v708
        %741 = vst [vmem:[%s284 + $0x60] sm:$0xff] %v709
        %742 = vst [vmem:[%s284 + $0x68] sm:$0xff] %v710
        %743 = vst [vmem:[%s284 + $0x70] sm:$0xff] %v711
        %744 = vst [vmem:[%s284 + $0x78] sm:$0xff] %v712
        %745 = vst [vmem:[%s284 + $0x80] sm:$0xff] %v713
        %746 = vst [vmem:[%s284 + $0x88] sm:$0xff] %v714
        %747 = vst [vmem:[%s284 + $0x90] sm:$0xff] %v715
        %748 = vst [vmem:[%s284 + $0x98] sm:$0xff] %v716
        %749 = vst [vmem:[%s284 + $0xa0] sm:$0xff] %v717
        %750 = vst [vmem:[%s284 + $0xa8] sm:$0xff] %v718
        %751 = vst [vmem:[%s284 + $0xb0] sm:$0xff] %v719
        %752 = vst [vmem:[%s284 + $0xb8] sm:$0xff] %v720
        %753 = vst [vmem:[%s284 + $0xc0] sm:$0xff] %v721
        %754 = vst [vmem:[%s284 + $0xc8] sm:$0xff] %v722
        %755 = vst [vmem:[%s284 + $0xd0] sm:$0xff] %v723
        %756 = vst [vmem:[%s284 + $0xd8] sm:$0xff] %v724
        %757 = vst [vmem:[%s284 + $0xe0] sm:$0xff] %v725
        %758 = vst [vmem:[%s284 + $0xe8] sm:$0xff] %v726
        %759 = vst [vmem:[%s284 + $0xf0] sm:$0xff] %v727
        %760 = vst [vmem:[%s284 + $0xf8] sm:$0xff] %v728
        %s761 = sand.u32 %s148, 1
        %s762 = scalar_lea.sflag [#allocation4], %s761
        %s763 = sand.u32 %s148, 1
        %s764 = smul.addr %s763, 256
        %s765 = scalar_lea.vmem [#allocation7], %s764
        // Predicated region
        $region45: #{tpu_custom_call.1} parent=35 // pred_check
          %p766 = pneg %p158
        $region46: #{tpu_custom_call.1} parent=35 // pred_check_branch
          %768 = sbr.rel (%p766) target = $region48
        $region47: #{tpu_custom_call.1} parent=35 // pred_region
          %s769 = smul.u32 16, %s26
          %s770 = smul.u32 2, %s27
          %s772 = ssub.s32 4096, 4096
          %773 = vsyncadd %s762, %s772
          %s774 = smul.addr %s769, 2
          %s775 = sadd.s32 %s770, %s774
          %s776 = smul.addr %s775, 128
          %s777 = scalar_lea.hbm %s4, %s776
          %s778 = sshll.u32 %s765, 4
          %s779 = int_to_ptr.vmem [resolvable:$true] %s778
          %784 = dma.vmem_to_hbm [thread:$0]  %s779, 4096, %s777, %s762, 256, 256, 16
        $region48: #{tpu_custom_call.1} parent=35 // pred_fallthru
          _
      $region36: #{tpu_custom_call.1} parent=5 // pred_fallthru
        _
      %p785 = scmp.le.s32.totalorder 2, %s17
      // Predicated region
      $region49: #{tpu_custom_call.1} parent=5 // pred_check
        %p786 = pneg %p785
      $region50: #{tpu_custom_call.1} parent=5 // pred_check_branch
        %788 = sbr.rel (%p786) target = $region52
      $region51: #{tpu_custom_call.1} parent=5 // pred_region
        %s789 = ssub.s32 %s17, 2
        // Predicated region
        $region53: #{tpu_custom_call.1} parent=51 // pred_check
          %p790 = pneg %p164
        $region54: #{tpu_custom_call.1} parent=51 // pred_check_branch
          %792 = sbr.rel (%p790) target = $region56
        $region55: #{tpu_custom_call.1} parent=51 // pred_region
          %s793 = sand.u32 %s149, 1
          %s794 = scalar_lea.sflag [#allocation4], %s793
          %s795 = sand.u32 %s149, 1
          %s796 = smul.addr %s795, 256
          %s797 = scalar_lea.vmem [#allocation7], %s796
          %798 = dma.done %s794, 4096
        $region56: #{tpu_custom_call.1} parent=51 // pred_fallthru
          _
      $region52: #{tpu_custom_call.1} parent=5 // pred_fallthru
        _
    $region6: #{tpu_custom_call.1} parent=1 // loop_footer
      %s21 = sadd.s32 1, %s17
    $region7: #{tpu_custom_call.1} parent=1 // loop_footer_branch
      %16 = sbr.rel target = $region3
    $region8: #{tpu_custom_call.1} parent=1 // loop_exit
      _
    %799 = vsyncpa [#allocation3], 1
    %s800 = scalar_lea.sflag [#allocation3], 1
    %801 = vsyncpa %s800, 1
    %802 = vsyncpa [#allocation6], 1
    %803 = vsyncpa [#allocation4], 1
    %s804 = scalar_lea.sflag [#allocation4], 1
    %805 = vsyncpa %s804, 1

</llo_original>
